<compile_context>
chip_gen: v7x
topology: tpu7x:2x2x1
jax: 0.10.0
libtpu: 0.0.40
codegen_flags: <defaults>
</compile_context>

<pallas_src>
import jax
import jax.numpy as jnp
from jax.experimental import pallas as pl
from jax.experimental.pallas import tpu as pltpu

N = 16          # number of nodes
IN_DIM = 32     # must equal HID_DIM: breadth_func is reused on its own output
HID_DIM = 32
OUT_DIM = 32
HEADS = 4
NEG_SLOPE = 0.2  # DGL GATConv default negative_slope

assert IN_DIM == HID_DIM, "GeniePathConv applies the same GAT weights to its own output"


# ---------------------------------------------------------------------------
# Fused kernel: GAT+head-mean (x2) + single-step LSTM, one invocation, all in VMEM.
# ---------------------------------------------------------------------------
def _geniepath_kernel(x_ref, adj0_ref, adj1_ref, wslab_ref, lstm_ref, h0_ref, c0_ref,
                      out_ref):
    wslab = wslab_ref[...]        # (IN, H*HID + 2H) = [ w | wl | wr ]          (32, 136)
    lstm = lstm_ref[...]          # (2*HID + 2, 4*OUT) = [ w_ih ; w_hh ; b ; gbm-pad ]
    gbm = lstm[2 * HID_DIM + 1:2 * HID_DIM + 2, :HID_DIM]   # (1, HID) head-mean of GAT bias

    def gat_mean(x, adj):
        # (a) ONE lane-dense MXU op yields both the per-head features z (cols :128) and
        #     the folded attention scores el|er (cols 128:136).
        zs = jnp.dot(x, wslab, preferred_element_type=jnp.float32)     # (N, 136)
        z = zs[:, :HEADS * HID_DIM]                                    # (N, H*HID) lane-dense
        st = zs[:, HEADS * HID_DIM:].T                                 # (2H, N) tiny transpose
        el = st[:HEADS]                                                # (H, Nsrc) source score
        er = st[HEADS:]                                                # (H, Ndst) dest score
        # (b) e[h, i, j] = er[i,h] + el[j,h]  for edge j -> i
        e = er[:, :, None] + el[:, None, :]                            # (H, Ndst, Nsrc)
        e = jnp.maximum(e, NEG_SLOPE * e)                              # LeakyReLU (slope<1 exact)
        e = jnp.where((adj > 0.0)[None], e, -1e30)                     # mask non-edges
        e = e - jnp.max(e, axis=-1, keepdims=True)
        p = jnp.exp(e)                         # masked entries underflow to exactly 0;
        denom = jnp.maximum(jnp.sum(p, axis=-1, keepdims=True), 1e-30)  # self-loops keep rows nonempty
        alpha = p / denom                                              # edge softmax over sources
        # (c) fused per-head aggregation + head-mean: ONE (N, H*N) @ (H*N, HID) MXU op.
        a_cat = jnp.concatenate([alpha[h] for h in range(HEADS)], axis=1)       # (N, H*N)
        z_cat = jnp.concatenate([z[:, h * HID_DIM:(h + 1) * HID_DIM]
                                 for h in range(HEADS)], axis=0)                # (H*N, HID)
        agg = jnp.dot(a_cat, z_cat, preferred_element_type=jnp.float32)         # (N, HID)
        return agg * (1.0 / HEADS) + gbm

    # breadth x2 — intermediates stay as in-kernel values, never round-trip to HBM
    x = gat_mean(x_ref[...], adj0_ref[...])
    x = gat_mean(x, adj1_ref[...])

    # depth: single-step LSTM (PyTorch gate order i, f, g, o), both matmuls fused.
    h0 = h0_ref[...]
    c0 = c0_ref[...]
    gates = (jnp.dot(jnp.concatenate([x, h0], axis=1), lstm[:2 * HID_DIM],
                     preferred_element_type=jnp.float32)
             + lstm[2 * HID_DIM:2 * HID_DIM + 1])                     # (N, 4*OUT) lane-dense
    O = OUT_DIM
    i = jax.nn.sigmoid(gates[:, 0 * O:1 * O])
    f = jax.nn.sigmoid(gates[:, 1 * O:2 * O])
    g = jnp.tanh(gates[:, 2 * O:3 * O])
    o = jax.nn.sigmoid(gates[:, 3 * O:4 * O])
    c_new = f * c0 + i * g
    h_new = o * jnp.tanh(c_new)
    out_ref[...] = jnp.concatenate([h_new, c_new], axis=1)            # (N, 2*OUT), single write


def geniepath_conv(adj0, adj1, x, h, c, params):
    w, al, ar, gb, w_ih, w_hh, b = params
    # Host-side parameter packing (exact algebraic folds; one-time cost for real models).
    w3 = w.reshape(IN_DIM, HEADS, HID_DIM)                              # [c, h, d]
    wl = jnp.einsum('chd,hd->ch', w3, al)                               # (IN, H): fold attn_l
    wr = jnp.einsum('chd,hd->ch', w3, ar)                               # (IN, H): fold attn_r
    wslab = jnp.concatenate([w, wl, wr], axis=1)                        # (IN, H*HID + 2H)
    gbm = jnp.mean(gb, axis=0)                                          # (HID,)
    gbm_row = jnp.zeros((1, 4 * OUT_DIM), jnp.float32).at[0, :HID_DIM].set(gbm)
    lstm_slab = jnp.concatenate([w_ih, w_hh, b, gbm_row], axis=0)       # (2*HID + 2, 4*OUT)

    vmem = pl.BlockSpec(memory_space=pltpu.MemorySpace.VMEM)
    out = pl.pallas_call(
        _geniepath_kernel,
        out_shape=jax.ShapeDtypeStruct((N, 2 * OUT_DIM), jnp.float32),
        in_specs=[vmem] * 7,
        out_specs=vmem,
    )(x, adj0, adj1, wslab, lstm_slab, h[0], c[0])
    h_new = out[:, :OUT_DIM]
    c_new = out[:, OUT_DIM:]
    # Single-layer, single-step LSTM: the sequence output equals the new hidden state.
    return h_new, (h_new[None], c_new[None])


# ---------------------------------------------------------------------------
# Pure-JAX reference (correctness check against the fused Pallas kernel).
# ---------------------------------------------------------------------------
def _gat_ref(x, adj, w, al, ar, bias):
    z = (x @ w).reshape(N, HEADS, HID_DIM)
    el = jnp.sum(z * al[None], axis=-1)            # (N, H)
    er = jnp.sum(z * ar[None], axis=-1)            # (N, H)
    e = el[None, :, :] + er[:, None, :]            # (N_dst, N_src, H)
    e = jnp.where(e >= 0, e, NEG_SLOPE * e)
    mask = (adj > 0)[..., None]
    e = jnp.where(mask, e, -1e30)
    p = jnp.where(mask, jnp.exp(e - jnp.max(e, axis=1, keepdims=True)), 0.0)
    alpha = p / jnp.maximum(jnp.sum(p, axis=1, keepdims=True), 1e-30)
    out = jnp.einsum("ijh,jhd->ihd", alpha, z) + bias[None]
    return out.mean(axis=1)


def _ref(adj0, adj1, x, h, c, params):
    w, al, ar, gb, w_ih, w_hh, b = params
    x = _gat_ref(x, adj0, w, al, ar, gb)
    x = _gat_ref(x, adj1, w, al, ar, gb)
    gates = x @ w_ih + h[0] @ w_hh + b
    O = OUT_DIM
    i = jax.nn.sigmoid(gates[:, 0 * O:1 * O])
    f = jax.nn.sigmoid(gates[:, 1 * O:2 * O])
    g = jnp.tanh(gates[:, 2 * O:3 * O])
    o = jax.nn.sigmoid(gates[:, 3 * O:4 * O])
    c_new = f * c[0] + i * g
    h_new = o * jnp.tanh(c_new)
    return h_new, (h_new[None], c_new[None])


if __name__ == "__main__":
    key = jax.random.PRNGKey(0)
    ks = jax.random.split(key, 10)

    # Deterministic parameter init (shapes per GATConv(in,hid,heads) + LSTM(hid,out)).
    w = 0.1 * jax.random.normal(ks[0], (IN_DIM, HEADS * HID_DIM), jnp.float32)   # fc weight
    al = 0.1 * jax.random.normal(ks[1], (HEADS, HID_DIM), jnp.float32)           # attn_l
    ar = 0.1 * jax.random.normal(ks[2], (HEADS, HID_DIM), jnp.float32)           # attn_r
    gb = jnp.zeros((HEADS, HID_DIM), jnp.float32)                                # GAT bias
    w_ih = 0.1 * jax.random.normal(ks[3], (HID_DIM, 4 * OUT_DIM), jnp.float32)   # LSTM weight_ih^T
    w_hh = 0.1 * jax.random.normal(ks[4], (OUT_DIM, 4 * OUT_DIM), jnp.float32)   # LSTM weight_hh^T
    b = 0.1 * jax.random.normal(ks[5], (1, 4 * OUT_DIM), jnp.float32)            # b_ih + b_hh
    params = (w, al, ar, gb, w_ih, w_hh, b)

    # Inputs: node features, two dense "blocks" (adjacency + self loops), LSTM state.
    x = jax.random.normal(ks[6], (N, IN_DIM), jnp.float32)
    adj0 = (jax.random.bernoulli(ks[7], 0.3, (N, N)).astype(jnp.float32)
            + jnp.eye(N, dtype=jnp.float32)).clip(0.0, 1.0)
    adj1 = (jax.random.bernoulli(ks[8], 0.3, (N, N)).astype(jnp.float32)
            + jnp.eye(N, dtype=jnp.float32)).clip(0.0, 1.0)
    h0 = jnp.zeros((1, N, OUT_DIM), jnp.float32)
    c0 = jnp.zeros((1, N, OUT_DIM), jnp.float32)

    y, (h1, c1) = geniepath_conv(adj0, adj1, x, h0, c0, params)
    jax.block_until_ready((y, h1, c1))

    y_ref, (h_ref, c_ref) = _ref(adj0, adj1, x, h0, c0, params)
    assert jnp.allclose(y, y_ref, atol=1e-4, rtol=1e-4)
    assert jnp.allclose(h1, h_ref, atol=1e-4, rtol=1e-4)
    assert jnp.allclose(c1, c_ref, atol=1e-4, rtol=1e-4)

    print("KERNEL_OK")
</pallas_src>

<mosaic_0001>
module attributes {stable_mosaic.version = 11 : i64} {
  func.func @_geniepath_kernel(%arg0: memref<16x32xf32, #tpu.memory_space<vmem>>, %arg1: memref<16x16xf32, #tpu.memory_space<vmem>>, %arg2: memref<16x16xf32, #tpu.memory_space<vmem>>, %arg3: memref<32x136xf32, #tpu.memory_space<vmem>>, %arg4: memref<66x128xf32, #tpu.memory_space<vmem>>, %arg5: memref<16x32xf32, #tpu.memory_space<vmem>>, %arg6: memref<16x32xf32, #tpu.memory_space<vmem>>, %arg7: memref<16x64xf32, #tpu.memory_space<vmem>>) attributes {dimension_semantics = [], scalar_prefetch = 0 : i64, scratch_operands = 0 : i64, tpu.core_type = #tpu.core_type<tc>} {
    %c0 = arith.constant 0 : index
    %c0_0 = arith.constant 0 : index
    %0 = vector.load %arg3[%c0, %c0_0] : memref<32x136xf32, #tpu.memory_space<vmem>>, vector<32x136xf32>
    %c0_1 = arith.constant 0 : index
    %c0_2 = arith.constant 0 : index
    %1 = vector.load %arg4[%c0_1, %c0_2] : memref<66x128xf32, #tpu.memory_space<vmem>>, vector<66x128xf32>
    %2 = vector.extract_strided_slice %1 {offsets = [65, 0], sizes = [1, 32], strides = [1, 1]} : vector<66x128xf32> to vector<1x32xf32>
    %c0_3 = arith.constant 0 : index
    %c0_4 = arith.constant 0 : index
    %3 = vector.load %arg0[%c0_3, %c0_4] : memref<16x32xf32, #tpu.memory_space<vmem>>, vector<16x32xf32>
    %c0_5 = arith.constant 0 : index
    %c0_6 = arith.constant 0 : index
    %4 = vector.load %arg1[%c0_5, %c0_6] : memref<16x16xf32, #tpu.memory_space<vmem>>, vector<16x16xf32>
    %cst = arith.constant dense<0.000000e+00> : vector<16x136xf32>
    %5 = tpu.matmul %3, %0, %cst {dimension_numbers = #tpu.dot_dimension_numbers<[1], [0], [0], [1], [0, 0, 1, 1], [], []>} : vector<16x32xf32>, vector<32x136xf32>, vector<16x136xf32> -> vector<16x136xf32>
    %6 = vector.extract_strided_slice %5 {offsets = [0, 0], sizes = [16, 128], strides = [1, 1]} : vector<16x136xf32> to vector<16x128xf32>
    %7 = vector.extract_strided_slice %5 {offsets = [0, 128], sizes = [16, 8], strides = [1, 1]} : vector<16x136xf32> to vector<16x8xf32>
    %8 = tpu.transpose %7, [1, 0] : vector<16x8xf32> -> vector<8x16xf32>
    %9 = vector.extract_strided_slice %8 {offsets = [0, 0], sizes = [4, 16], strides = [1, 1]} : vector<8x16xf32> to vector<4x16xf32>
    %10 = vector.extract_strided_slice %8 {offsets = [4, 0], sizes = [4, 16], strides = [1, 1]} : vector<8x16xf32> to vector<4x16xf32>
    %11 = vector.shape_cast %10 : vector<4x16xf32> to vector<4x16x1xf32>
    %12 = vector.shape_cast %9 : vector<4x16xf32> to vector<4x1x16xf32>
    %13 = vector.broadcast %11 : vector<4x16x1xf32> to vector<4x16x16xf32>
    %14 = vector.broadcast %12 : vector<4x1x16xf32> to vector<4x16x16xf32>
    %15 = arith.addf %13, %14 : vector<4x16x16xf32>
    %cst_7 = arith.constant 2.000000e-01 : f32
    %16 = vector.broadcast %cst_7 : f32 to vector<4x16x16xf32>
    %17 = arith.mulf %16, %15 : vector<4x16x16xf32>
    %18 = arith.maximumf %15, %17 : vector<4x16x16xf32>
    %cst_8 = arith.constant 0.000000e+00 : f32
    %19 = vector.broadcast %cst_8 : f32 to vector<16x16xf32>
    %20 = arith.cmpf ogt, %4, %19 : vector<16x16xf32>
    %21 = vector.shape_cast %20 : vector<16x16xi1> to vector<1x16x16xi1>
    %cst_9 = arith.constant -1.000000e+30 : f32
    %22 = vector.shape_cast %21 : vector<1x16x16xi1> to vector<1x16x16xi1>
    %23 = vector.broadcast %22 : vector<1x16x16xi1> to vector<4x16x16xi1>
    %24 = vector.broadcast %cst_9 : f32 to vector<4x16x16xf32>
    %25 = arith.select %23, %18, %24 : vector<4x16x16xi1>, vector<4x16x16xf32>
    %cst_10 = arith.constant dense<0xFF800000> : vector<4x16xf32>
    %26 = vector.multi_reduction <maximumf>, %25, %cst_10 [2] : vector<4x16x16xf32> to vector<4x16xf32>
    %27 = vector.shape_cast %26 : vector<4x16xf32> to vector<4x16x1xf32>
    %28 = vector.broadcast %27 : vector<4x16x1xf32> to vector<4x16x16xf32>
    %29 = arith.subf %25, %28 : vector<4x16x16xf32>
    %30 = math.exp %29 : vector<4x16x16xf32>
    %cst_11 = arith.constant dense<0.000000e+00> : vector<4x16xf32>
    %31 = vector.multi_reduction <add>, %30, %cst_11 [2] : vector<4x16x16xf32> to vector<4x16xf32>
    %32 = vector.shape_cast %31 : vector<4x16xf32> to vector<4x16x1xf32>
    %cst_12 = arith.constant 1.000000e-30 : f32
    %33 = vector.broadcast %cst_12 : f32 to vector<4x16x1xf32>
    %34 = arith.maximumf %32, %33 : vector<4x16x1xf32>
    %35 = vector.broadcast %34 : vector<4x16x1xf32> to vector<4x16x16xf32>
    %36 = arith.divf %30, %35 : vector<4x16x16xf32>
    %37 = vector.extract_strided_slice %36 {offsets = [0, 0, 0], sizes = [1, 16, 16], strides = [1, 1, 1]} : vector<4x16x16xf32> to vector<1x16x16xf32>
    %38 = vector.shape_cast %37 : vector<1x16x16xf32> to vector<16x16xf32>
    %39 = vector.extract_strided_slice %36 {offsets = [1, 0, 0], sizes = [1, 16, 16], strides = [1, 1, 1]} : vector<4x16x16xf32> to vector<1x16x16xf32>
    %40 = vector.shape_cast %39 : vector<1x16x16xf32> to vector<16x16xf32>
    %41 = vector.extract_strided_slice %36 {offsets = [2, 0, 0], sizes = [1, 16, 16], strides = [1, 1, 1]} : vector<4x16x16xf32> to vector<1x16x16xf32>
    %42 = vector.shape_cast %41 : vector<1x16x16xf32> to vector<16x16xf32>
    %43 = vector.extract_strided_slice %36 {offsets = [3, 0, 0], sizes = [1, 16, 16], strides = [1, 1, 1]} : vector<4x16x16xf32> to vector<1x16x16xf32>
    %44 = vector.shape_cast %43 : vector<1x16x16xf32> to vector<16x16xf32>
    %45 = tpu.concatenate %38, %40, %42, %44 in 1 : vector<16x16xf32>, vector<16x16xf32>, vector<16x16xf32>, vector<16x16xf32> -> vector<16x64xf32>
    %46 = vector.extract_strided_slice %6 {offsets = [0, 0], sizes = [16, 32], strides = [1, 1]} : vector<16x128xf32> to vector<16x32xf32>
    %47 = vector.extract_strided_slice %6 {offsets = [0, 32], sizes = [16, 32], strides = [1, 1]} : vector<16x128xf32> to vector<16x32xf32>
    %48 = vector.extract_strided_slice %6 {offsets = [0, 64], sizes = [16, 32], strides = [1, 1]} : vector<16x128xf32> to vector<16x32xf32>
    %49 = vector.extract_strided_slice %6 {offsets = [0, 96], sizes = [16, 32], strides = [1, 1]} : vector<16x128xf32> to vector<16x32xf32>
    %50 = tpu.concatenate %46, %47, %48, %49 in 0 : vector<16x32xf32>, vector<16x32xf32>, vector<16x32xf32>, vector<16x32xf32> -> vector<64x32xf32>
    %cst_13 = arith.constant dense<0.000000e+00> : vector<16x32xf32>
    %51 = tpu.matmul %45, %50, %cst_13 {dimension_numbers = #tpu.dot_dimension_numbers<[1], [0], [0], [1], [0, 0, 1, 1], [], []>} : vector<16x64xf32>, vector<64x32xf32>, vector<16x32xf32> -> vector<16x32xf32>
    %cst_14 = arith.constant 2.500000e-01 : f32
    %52 = vector.broadcast %cst_14 : f32 to vector<16x32xf32>
    %53 = arith.mulf %51, %52 : vector<16x32xf32>
    %54 = vector.broadcast %2 : vector<1x32xf32> to vector<16x32xf32>
    %55 = arith.addf %53, %54 : vector<16x32xf32>
    %c0_15 = arith.constant 0 : index
    %c0_16 = arith.constant 0 : index
    %56 = vector.load %arg2[%c0_15, %c0_16] : memref<16x16xf32, #tpu.memory_space<vmem>>, vector<16x16xf32>
    %cst_17 = arith.constant dense<0.000000e+00> : vector<16x136xf32>
    %57 = tpu.matmul %55, %0, %cst_17 {dimension_numbers = #tpu.dot_dimension_numbers<[1], [0], [0], [1], [0, 0, 1, 1], [], []>} : vector<16x32xf32>, vector<32x136xf32>, vector<16x136xf32> -> vector<16x136xf32>
    %58 = vector.extract_strided_slice %57 {offsets = [0, 0], sizes = [16, 128], strides = [1, 1]} : vector<16x136xf32> to vector<16x128xf32>
    %59 = vector.extract_strided_slice %57 {offsets = [0, 128], sizes = [16, 8], strides = [1, 1]} : vector<16x136xf32> to vector<16x8xf32>
    %60 = tpu.transpose %59, [1, 0] : vector<16x8xf32> -> vector<8x16xf32>
    %61 = vector.extract_strided_slice %60 {offsets = [0, 0], sizes = [4, 16], strides = [1, 1]} : vector<8x16xf32> to vector<4x16xf32>
    %62 = vector.extract_strided_slice %60 {offsets = [4, 0], sizes = [4, 16], strides = [1, 1]} : vector<8x16xf32> to vector<4x16xf32>
    %63 = vector.shape_cast %62 : vector<4x16xf32> to vector<4x16x1xf32>
    %64 = vector.shape_cast %61 : vector<4x16xf32> to vector<4x1x16xf32>
    %65 = vector.broadcast %63 : vector<4x16x1xf32> to vector<4x16x16xf32>
    %66 = vector.broadcast %64 : vector<4x1x16xf32> to vector<4x16x16xf32>
    %67 = arith.addf %65, %66 : vector<4x16x16xf32>
    %cst_18 = arith.constant 2.000000e-01 : f32
    %68 = vector.broadcast %cst_18 : f32 to vector<4x16x16xf32>
    %69 = arith.mulf %68, %67 : vector<4x16x16xf32>
    %70 = arith.maximumf %67, %69 : vector<4x16x16xf32>
    %cst_19 = arith.constant 0.000000e+00 : f32
    %71 = vector.broadcast %cst_19 : f32 to vector<16x16xf32>
    %72 = arith.cmpf ogt, %56, %71 : vector<16x16xf32>
    %73 = vector.shape_cast %72 : vector<16x16xi1> to vector<1x16x16xi1>
    %cst_20 = arith.constant -1.000000e+30 : f32
    %74 = vector.shape_cast %73 : vector<1x16x16xi1> to vector<1x16x16xi1>
    %75 = vector.broadcast %74 : vector<1x16x16xi1> to vector<4x16x16xi1>
    %76 = vector.broadcast %cst_20 : f32 to vector<4x16x16xf32>
    %77 = arith.select %75, %70, %76 : vector<4x16x16xi1>, vector<4x16x16xf32>
    %cst_21 = arith.constant dense<0xFF800000> : vector<4x16xf32>
    %78 = vector.multi_reduction <maximumf>, %77, %cst_21 [2] : vector<4x16x16xf32> to vector<4x16xf32>
    %79 = vector.shape_cast %78 : vector<4x16xf32> to vector<4x16x1xf32>
    %80 = vector.broadcast %79 : vector<4x16x1xf32> to vector<4x16x16xf32>
    %81 = arith.subf %77, %80 : vector<4x16x16xf32>
    %82 = math.exp %81 : vector<4x16x16xf32>
    %cst_22 = arith.constant dense<0.000000e+00> : vector<4x16xf32>
    %83 = vector.multi_reduction <add>, %82, %cst_22 [2] : vector<4x16x16xf32> to vector<4x16xf32>
    %84 = vector.shape_cast %83 : vector<4x16xf32> to vector<4x16x1xf32>
    %cst_23 = arith.constant 1.000000e-30 : f32
    %85 = vector.broadcast %cst_23 : f32 to vector<4x16x1xf32>
    %86 = arith.maximumf %84, %85 : vector<4x16x1xf32>
    %87 = vector.broadcast %86 : vector<4x16x1xf32> to vector<4x16x16xf32>
    %88 = arith.divf %82, %87 : vector<4x16x16xf32>
    %89 = vector.extract_strided_slice %88 {offsets = [0, 0, 0], sizes = [1, 16, 16], strides = [1, 1, 1]} : vector<4x16x16xf32> to vector<1x16x16xf32>
    %90 = vector.shape_cast %89 : vector<1x16x16xf32> to vector<16x16xf32>
    %91 = vector.extract_strided_slice %88 {offsets = [1, 0, 0], sizes = [1, 16, 16], strides = [1, 1, 1]} : vector<4x16x16xf32> to vector<1x16x16xf32>
    %92 = vector.shape_cast %91 : vector<1x16x16xf32> to vector<16x16xf32>
    %93 = vector.extract_strided_slice %88 {offsets = [2, 0, 0], sizes = [1, 16, 16], strides = [1, 1, 1]} : vector<4x16x16xf32> to vector<1x16x16xf32>
    %94 = vector.shape_cast %93 : vector<1x16x16xf32> to vector<16x16xf32>
    %95 = vector.extract_strided_slice %88 {offsets = [3, 0, 0], sizes = [1, 16, 16], strides = [1, 1, 1]} : vector<4x16x16xf32> to vector<1x16x16xf32>
    %96 = vector.shape_cast %95 : vector<1x16x16xf32> to vector<16x16xf32>
    %97 = tpu.concatenate %90, %92, %94, %96 in 1 : vector<16x16xf32>, vector<16x16xf32>, vector<16x16xf32>, vector<16x16xf32> -> vector<16x64xf32>
    %98 = vector.extract_strided_slice %58 {offsets = [0, 0], sizes = [16, 32], strides = [1, 1]} : vector<16x128xf32> to vector<16x32xf32>
    %99 = vector.extract_strided_slice %58 {offsets = [0, 32], sizes = [16, 32], strides = [1, 1]} : vector<16x128xf32> to vector<16x32xf32>
    %100 = vector.extract_strided_slice %58 {offsets = [0, 64], sizes = [16, 32], strides = [1, 1]} : vector<16x128xf32> to vector<16x32xf32>
    %101 = vector.extract_strided_slice %58 {offsets = [0, 96], sizes = [16, 32], strides = [1, 1]} : vector<16x128xf32> to vector<16x32xf32>
    %102 = tpu.concatenate %98, %99, %100, %101 in 0 : vector<16x32xf32>, vector<16x32xf32>, vector<16x32xf32>, vector<16x32xf32> -> vector<64x32xf32>
    %cst_24 = arith.constant dense<0.000000e+00> : vector<16x32xf32>
    %103 = tpu.matmul %97, %102, %cst_24 {dimension_numbers = #tpu.dot_dimension_numbers<[1], [0], [0], [1], [0, 0, 1, 1], [], []>} : vector<16x64xf32>, vector<64x32xf32>, vector<16x32xf32> -> vector<16x32xf32>
    %cst_25 = arith.constant 2.500000e-01 : f32
    %104 = vector.broadcast %cst_25 : f32 to vector<16x32xf32>
    %105 = arith.mulf %103, %104 : vector<16x32xf32>
    %106 = vector.broadcast %2 : vector<1x32xf32> to vector<16x32xf32>
    %107 = arith.addf %105, %106 : vector<16x32xf32>
    %c0_26 = arith.constant 0 : index
    %c0_27 = arith.constant 0 : index
    %108 = vector.load %arg5[%c0_26, %c0_27] : memref<16x32xf32, #tpu.memory_space<vmem>>, vector<16x32xf32>
    %c0_28 = arith.constant 0 : index
    %c0_29 = arith.constant 0 : index
    %109 = vector.load %arg6[%c0_28, %c0_29] : memref<16x32xf32, #tpu.memory_space<vmem>>, vector<16x32xf32>
    %110 = tpu.concatenate %107, %108 in 1 : vector<16x32xf32>, vector<16x32xf32> -> vector<16x64xf32>
    %111 = vector.extract_strided_slice %1 {offsets = [0, 0], sizes = [64, 128], strides = [1, 1]} : vector<66x128xf32> to vector<64x128xf32>
    %cst_30 = arith.constant dense<0.000000e+00> : vector<16x128xf32>
    %112 = tpu.matmul %110, %111, %cst_30 {dimension_numbers = #tpu.dot_dimension_numbers<[1], [0], [0], [1], [0, 0, 1, 1], [], []>} : vector<16x64xf32>, vector<64x128xf32>, vector<16x128xf32> -> vector<16x128xf32>
    %113 = vector.extract_strided_slice %1 {offsets = [64, 0], sizes = [1, 128], strides = [1, 1]} : vector<66x128xf32> to vector<1x128xf32>
    %114 = vector.broadcast %113 : vector<1x128xf32> to vector<16x128xf32>
    %115 = arith.addf %112, %114 : vector<16x128xf32>
    %116 = vector.extract_strided_slice %115 {offsets = [0, 0], sizes = [16, 32], strides = [1, 1]} : vector<16x128xf32> to vector<16x32xf32>
    %117 = arith.negf %116 : vector<16x32xf32>
    %118 = math.exp %117 : vector<16x32xf32>
    %cst_31 = arith.constant 1.000000e+00 : f32
    %119 = vector.broadcast %cst_31 : f32 to vector<16x32xf32>
    %120 = arith.addf %119, %118 : vector<16x32xf32>
    %121 = arith.divf %119, %120 : vector<16x32xf32>
    %122 = vector.extract_strided_slice %115 {offsets = [0, 32], sizes = [16, 32], strides = [1, 1]} : vector<16x128xf32> to vector<16x32xf32>
    %123 = arith.negf %122 : vector<16x32xf32>
    %124 = math.exp %123 : vector<16x32xf32>
    %cst_32 = arith.constant 1.000000e+00 : f32
    %125 = vector.broadcast %cst_32 : f32 to vector<16x32xf32>
    %126 = arith.addf %125, %124 : vector<16x32xf32>
    %127 = arith.divf %125, %126 : vector<16x32xf32>
    %128 = vector.extract_strided_slice %115 {offsets = [0, 64], sizes = [16, 32], strides = [1, 1]} : vector<16x128xf32> to vector<16x32xf32>
    %129 = math.tanh %128 : vector<16x32xf32>
    %130 = vector.extract_strided_slice %115 {offsets = [0, 96], sizes = [16, 32], strides = [1, 1]} : vector<16x128xf32> to vector<16x32xf32>
    %131 = arith.negf %130 : vector<16x32xf32>
    %132 = math.exp %131 : vector<16x32xf32>
    %cst_33 = arith.constant 1.000000e+00 : f32
    %133 = vector.broadcast %cst_33 : f32 to vector<16x32xf32>
    %134 = arith.addf %133, %132 : vector<16x32xf32>
    %135 = arith.divf %133, %134 : vector<16x32xf32>
    %136 = arith.mulf %127, %109 : vector<16x32xf32>
    %137 = arith.mulf %121, %129 : vector<16x32xf32>
    %138 = arith.addf %136, %137 : vector<16x32xf32>
    %139 = math.tanh %138 : vector<16x32xf32>
    %140 = arith.mulf %135, %139 : vector<16x32xf32>
    %141 = tpu.concatenate %140, %138 in 1 : vector<16x32xf32>, vector<16x32xf32> -> vector<16x64xf32>
    %c0_34 = arith.constant 0 : index
    %c0_35 = arith.constant 0 : index
    %142 = vector.load %arg7[%c0_34, %c0_35] : memref<16x64xf32, #tpu.memory_space<vmem>>, vector<16x64xf32>
    tpu.vector_store %arg7[%c0_34, %c0_35], %141 {strides = array<i32>} : memref<16x64xf32, #tpu.memory_space<vmem>>, vector<16x64xf32>,
    return
  }
}

</mosaic_0001>

<llo_original>
// kernel: tpu_custom_call.1
$region0: #{tpu_custom_call.1}
  #allocation0 [shape = 'u32[]', space=smem, size = 0x4, offset = 0x4, fixed_abs, tag = 'smem constant byte address 0x4 - core index']
  #allocation1 [shape = 'u32[144,128]{1,0:T(1,128)}', space=vmem, size = 0x12000, scoped, tag = 'internal scratch']
  %s0 = inlined_call_operand.hbm [shape: f32[16,32], index: 0, kind: input, shape index: {}]
  %s1 = inlined_call_operand.hbm [shape: f32[16,16], index: 1, kind: input, shape index: {}]
  %s2 = inlined_call_operand.hbm [shape: f32[16,16], index: 2, kind: input, shape index: {}]
  %s3 = inlined_call_operand.hbm [shape: f32[32,136], index: 3, kind: input, shape index: {}]
  %s4 = inlined_call_operand.hbm [shape: f32[66,128], index: 4, kind: input, shape index: {}]
  %s5 = inlined_call_operand.vmem [shape: f32[16,32], index: 5, kind: input, shape index: {}]
  %s6 = inlined_call_operand.hbm [shape: f32[16,32], index: 6, kind: input, shape index: {}]
  %s7 = inlined_call_operand.hbm [shape: f32[16,64], index: 7, kind: output, shape index: {}]
  %s8 = sld [smem:[#allocation0]]
  $region62: #{tpu_custom_call.1} parent=0
    _
  %s10 = ssub.s32 1, %s8
  %s11 = scalar_select 0, %s10, %s8
  $region1: #{tpu_custom_call.1} parent=0
    #allocation2 [shape = 'u8[8192]{0}', space=vmem, size = 0x2000, scoped, tag = 'input window, operand 0, single buffered']
    #allocation3 [shape = 's32[1]{0}', space=sflag, size = 0x4, scoped, tag = 'scoped memory for tpu_custom_call.1']
    #allocation4 [shape = 's32[1]{0}', space=sflag, size = 0x4, scoped, tag = 'scoped memory for tpu_custom_call.1']
    #allocation5 [shape = 'u8[8192]{0}', space=vmem, size = 0x2000, scoped, tag = 'input window, operand 1, single buffered']
    #allocation6 [shape = 's32[1]{0}', space=sflag, size = 0x4, scoped, tag = 'scoped memory for tpu_custom_call.1']
    #allocation7 [shape = 'u8[8192]{0}', space=vmem, size = 0x2000, scoped, tag = 'input window, operand 2, single buffered']
    #allocation8 [shape = 'u8[32768]{0}', space=vmem, size = 0x8000, scoped, tag = 'input window, operand 3, single buffered']
    #allocation9 [shape = 's32[1]{0}', space=sflag, size = 0x4, scoped, tag = 'scoped memory for tpu_custom_call.1']
    #allocation10 [shape = 'u8[36864]{0}', space=vmem, size = 0x9000, scoped, tag = 'input window, operand 4, single buffered']
    #allocation11 [shape = 'u8[8192]{0}', space=vmem, size = 0x2000, scoped, tag = 'input window, operand 6, single buffered']
    #allocation12 [shape = 's32[1]{0}', space=sflag, size = 0x4, scoped, tag = 'scoped memory for tpu_custom_call.1']
    #allocation13 [shape = 'u8[8192]{0}', space=vmem, size = 0x2000, scoped, tag = 'output window, operand 0, single buffered']
    %12 = vsyncpa [#allocation3], 0
    %13 = vsyncpa [#allocation6], 0
    %14 = vsyncpa [#allocation9], 0
    %15 = vsyncpa [#allocation12], 0
    %16 = vsyncpa [#allocation4], 0
    // Predicated region
    $region2: #{tpu_custom_call.1} parent=1 // pred_check
      _
    $region3: #{tpu_custom_call.1} parent=1 // pred_check_branch
      %18 = sbr.rel (0) target = $region5
    $region4: #{tpu_custom_call.1} parent=1 // pred_region
      %s20 = ssub.s32 256, 256
      %21 = vsyncadd [#allocation3], %s20
      %s22 = sshll.u32 [#allocation2], 4
      %s23 = int_to_ptr.vmem [resolvable:$true] %s22
      %28 = dma.hbm_to_vmem [thread:$0]  %s0, 256, %s23, [#allocation3], 128, 128, 8
    $region5: #{tpu_custom_call.1} parent=1 // pred_fallthru
      _
    // Predicated region
    $region6: #{tpu_custom_call.1} parent=1 // pred_check
      _
    $region7: #{tpu_custom_call.1} parent=1 // pred_check_branch
      %30 = sbr.rel (0) target = $region9
    $region8: #{tpu_custom_call.1} parent=1 // pred_region
      %s32 = ssub.s32 256, 256
      %33 = vsyncadd [#allocation6], %s32
      %s34 = sshll.u32 [#allocation5], 4
      %s35 = int_to_ptr.vmem [resolvable:$true] %s34
      %40 = dma.hbm_to_vmem [thread:$0]  %s1, 256, %s35, [#allocation6], 128, 128, 8
    $region9: #{tpu_custom_call.1} parent=1 // pred_fallthru
      _
    // Predicated region
    $region10: #{tpu_custom_call.1} parent=1 // pred_check
      _
    $region11: #{tpu_custom_call.1} parent=1 // pred_check_branch
      %42 = sbr.rel (0) target = $region13
    $region12: #{tpu_custom_call.1} parent=1 // pred_region
      %s44 = ssub.s32 256, 256
      %45 = vsyncadd [#allocation6], %s44
      %s46 = sshll.u32 [#allocation7], 4
      %s47 = int_to_ptr.vmem [resolvable:$true] %s46
      %52 = dma.hbm_to_vmem [thread:$0]  %s2, 256, %s47, [#allocation6], 128, 128, 8
    $region13: #{tpu_custom_call.1} parent=1 // pred_fallthru
      _
    // Predicated region
    $region14: #{tpu_custom_call.1} parent=1 // pred_check
      _
    $region15: #{tpu_custom_call.1} parent=1 // pred_check_branch
      %54 = sbr.rel (0) target = $region17
    $region16: #{tpu_custom_call.1} parent=1 // pred_region
      %s56 = ssub.s32 1024, 1024
      %57 = vsyncadd [#allocation9], %s56
      %s58 = sshll.u32 [#allocation8], 4
      %s59 = int_to_ptr.vmem [resolvable:$true] %s58
      %64 = dma.hbm_to_vmem [thread:$0]  %s3, 1024, %s59, [#allocation9], 256, 256, 16
    $region17: #{tpu_custom_call.1} parent=1 // pred_fallthru
      _
    // Predicated region
    $region18: #{tpu_custom_call.1} parent=1 // pred_check
      _
    $region19: #{tpu_custom_call.1} parent=1 // pred_check_branch
      %66 = sbr.rel (0) target = $region21
    $region20: #{tpu_custom_call.1} parent=1 // pred_region
      %s68 = ssub.s32 1152, 1152
      %69 = vsyncadd [#allocation9], %s68
      %s70 = sshll.u32 [#allocation10], 4
      %s71 = int_to_ptr.vmem [resolvable:$true] %s70
      %76 = dma.hbm_to_vmem [thread:$0]  %s4, 1152, %s71, [#allocation9], 128, 128, 8
    $region21: #{tpu_custom_call.1} parent=1 // pred_fallthru
      _
    // Predicated region
    $region22: #{tpu_custom_call.1} parent=1 // pred_check
      _
    $region23: #{tpu_custom_call.1} parent=1 // pred_check_branch
      %78 = sbr.rel (0) target = $region25
    $region24: #{tpu_custom_call.1} parent=1 // pred_region
      _
    $region25: #{tpu_custom_call.1} parent=1 // pred_fallthru
      _
    // Predicated region
    $region26: #{tpu_custom_call.1} parent=1 // pred_check
      _
    $region27: #{tpu_custom_call.1} parent=1 // pred_check_branch
      %80 = sbr.rel (0) target = $region29
    $region28: #{tpu_custom_call.1} parent=1 // pred_region
      %s82 = ssub.s32 256, 256
      %83 = vsyncadd [#allocation12], %s82
      %s84 = sshll.u32 [#allocation11], 4
      %s85 = int_to_ptr.vmem [resolvable:$true] %s84
      %90 = dma.hbm_to_vmem [thread:$0]  %s6, 256, %s85, [#allocation12], 128, 128, 8
    $region29: #{tpu_custom_call.1} parent=1 // pred_fallthru
      _
    // Predicated region
    $region30: #{tpu_custom_call.1} parent=1 // pred_check
      _
    $region31: #{tpu_custom_call.1} parent=1 // pred_check_branch
      %92 = sbr.rel (0) target = $region33
    $region32: #{tpu_custom_call.1} parent=1 // pred_region
      %93 = dma.done [#allocation3], 256
    $region33: #{tpu_custom_call.1} parent=1 // pred_fallthru
      _
    // Predicated region
    $region34: #{tpu_custom_call.1} parent=1 // pred_check
      _
    $region35: #{tpu_custom_call.1} parent=1 // pred_check_branch
      %95 = sbr.rel (0) target = $region37
    $region36: #{tpu_custom_call.1} parent=1 // pred_region
      %96 = dma.done [#allocation6], 256
    $region37: #{tpu_custom_call.1} parent=1 // pred_fallthru
      _
    // Predicated region
    $region38: #{tpu_custom_call.1} parent=1 // pred_check
      _
    $region39: #{tpu_custom_call.1} parent=1 // pred_check_branch
      %98 = sbr.rel (0) target = $region41
    $region40: #{tpu_custom_call.1} parent=1 // pred_region
      %99 = dma.done [#allocation6], 256
    $region41: #{tpu_custom_call.1} parent=1 // pred_fallthru
      _
    // Predicated region
    $region42: #{tpu_custom_call.1} parent=1 // pred_check
      _
    $region43: #{tpu_custom_call.1} parent=1 // pred_check_branch
      %101 = sbr.rel (0) target = $region45
    $region44: #{tpu_custom_call.1} parent=1 // pred_region
      %102 = dma.done [#allocation9], 1024
    $region45: #{tpu_custom_call.1} parent=1 // pred_fallthru
      _
    // Predicated region
    $region46: #{tpu_custom_call.1} parent=1 // pred_check
      _
    $region47: #{tpu_custom_call.1} parent=1 // pred_check_branch
      %104 = sbr.rel (0) target = $region49
    $region48: #{tpu_custom_call.1} parent=1 // pred_region
      %105 = dma.done [#allocation9], 1152
    $region49: #{tpu_custom_call.1} parent=1 // pred_fallthru
      _
    // Predicated region
    $region50: #{tpu_custom_call.1} parent=1 // pred_check
      _
    $region51: #{tpu_custom_call.1} parent=1 // pred_check_branch
      %107 = sbr.rel (0) target = $region53
    $region52: #{tpu_custom_call.1} parent=1 // pred_region
      %108 = dma.done [#allocation12], 256
    $region53: #{tpu_custom_call.1} parent=1 // pred_fallthru
      _
    %v109 = vld [vmem:[#allocation8] sm:$0xff]
    %v110 = vld [vmem:[#allocation8 + $0x8] sm:$0xff]
    %v111 = vld [vmem:[#allocation8 + $0x10] sm:$0xff]
    %v112 = vld [vmem:[#allocation8 + $0x18] sm:$0xff]
    %v113 = vld [vmem:[#allocation8 + $0x20] sm:$0xff]
    %v114 = vld [vmem:[#allocation8 + $0x28] sm:$0xff]
    %v115 = vld [vmem:[#allocation8 + $0x30] sm:$0xff]
    %v116 = vld [vmem:[#allocation8 + $0x38] sm:$0xff]
    %v117 = vld [vmem:[#allocation10] sm:$0xff]
    %v118 = vld [vmem:[#allocation10 + $0x8] sm:$0xff]
    %v119 = vld [vmem:[#allocation10 + $0x10] sm:$0xff]
    %v120 = vld [vmem:[#allocation10 + $0x18] sm:$0xff]
    %v121 = vld [vmem:[#allocation10 + $0x20] sm:$0xff]
    %v122 = vld [vmem:[#allocation10 + $0x28] sm:$0xff]
    %v123 = vld [vmem:[#allocation10 + $0x30] sm:$0xff]
    %v124 = vld [vmem:[#allocation10 + $0x38] sm:$0xff]
    %v125 = vld [vmem:[#allocation10 + $0x40] sm:$0x3]
    %v126 = vld [vmem:[#allocation2] sm:$0xff]
    %v127 = vld [vmem:[#allocation2 + $0x8] sm:$0xff]
    %v128 = vld [vmem:[#allocation5] sm:$0xff]
    %v129 = vld [vmem:[#allocation5 + $0x8] sm:$0xff]
    %vm130 = vcmask 261120
    %v132 = vsel %vm130, %v126, 0
    %v135 = vsel %vm130, %v127, 0
    %137 = vmatprep.subr.mxu0 %v110
    %138 = vmatpush1.msra.mxu0 %v109
    %139 = vmatprep.subr.mxu0 %v112
    %140 = vmatpush1.msra.mxu0 %v111
    %141 = vmatprep.subr.mxu0 %v114
    %142 = vmatpush1.msra.mxu0 %v113
    %143 = vmatprep.subr.mxu0 %v116
    %144 = vmatpush1.msra.mxu0 %v115
    %145 = vmatprep.subr.mxu0 0.0
    %146 = vmatpush1.msra.mxu0 0.0
    %147 = vmatprep.subr.mxu0 0.0
    %148 = vmatpush1.msra.mxu0 0.0
    %149 = vmatprep.subr.mxu0 0.0
    %150 = vmatpush1.msra.mxu0 0.0
    %151 = vmatprep.subr.mxu0 0.0
    %152 = vmatpush1.msra.mxu0 0.0
    %153 = vmatprep.subr.mxu0 0.0
    %154 = vmatpush1.msra.mxu0 0.0
    %155 = vmatprep.subr.mxu0 0.0
    %156 = vmatpush1.msra.mxu0 0.0
    %157 = vmatprep.subr.mxu0 0.0
    %158 = vmatpush1.msra.mxu0 0.0
    %159 = vmatprep.subr.mxu0 0.0
    %160 = vmatpush1.msra.mxu0 0.0
    %161 = vmatprep.subr.mxu0 0.0
    %162 = vmatpush1.msra.mxu0 0.0
    %163 = vmatprep.subr.mxu0 0.0
    %164 = vmatpush1.msra.mxu0 0.0
    %165 = vmatprep.subr.mxu0 0.0
    %166 = vmatpush1.msra.mxu0 0.0
    %167 = vmatprep.subr.mxu0 0.0
    %168 = vmatpush1.msra.mxu0 0.0
    %169 = vmatprep.subr.mxu0 0.0
    %170 = vmatpush1.msra.mxu0 0.0
    %171 = vmatprep.subr.mxu0 0.0
    %172 = vmatpush1.msra.mxu0 0.0
    %173 = vmatprep.subr.mxu0 0.0
    %174 = vmatpush1.msra.mxu0 0.0
    %175 = vmatprep.subr.mxu0 0.0
    %176 = vmatpush1.msra.mxu0 0.0
    %177 = vmatprep.subr.mxu0 0.0
    %178 = vmatpush1.msra.mxu0 0.0
    %179 = vmatprep.subr.mxu0 0.0
    %180 = vmatpush1.msra.mxu0 0.0
    %181 = vmatprep.subr.mxu0 0.0
    %182 = vmatpush1.msra.mxu0 0.0
    %183 = vmatprep.subr.mxu0 0.0
    %184 = vmatpush1.msra.mxu0 0.0
    %185 = vmatprep.subr.mxu0 0.0
    %186 = vmatpush1.msra.mxu0 0.0
    %187 = vmatprep.subr.mxu0 0.0
    %188 = vmatpush1.msra.mxu0 0.0
    %189 = vmatprep.subr.mxu0 0.0
    %190 = vmatpush1.msra.mxu0 0.0
    %191 = vmatprep.subr.mxu0 0.0
    %192 = vmatpush1.msra.mxu0 0.0
    %193 = vmatprep.subr.mxu0 0.0
    %194 = vmatpush1.msra.mxu0 0.0
    %195 = vmatprep.subr.mxu0 0.0
    %196 = vmatpush1.msra.mxu0 0.0
    %197 = vmatprep.subr.mxu0 0.0
    %198 = vmatpush1.msra.mxu0 0.0
    %199 = vmatprep.subr.mxu0 0.0
    %200 = vmatpush1.msra.mxu0 0.0
    %201 = vmatprep.mubr.f32.mxu0 0.0
    %202 = vmatmul.mubr.f32.gmra.mrb[0].mxu0 %v132
    %v203 = vpop.f32.mrb[0].mxu0
    %v204 = vadd.f32 0.0, %v203
    %v205 = vpop.f32.mrb[0].mxu0
    %v206 = vadd.f32 0.0, %v205
    %207 = vmatprep.mubr.f32.mxu0 0.0
    %208 = vmatmul.mubr.f32.gmra.mrb[0].mxu0 %v135
    %v209 = vpop.f32.mrb[0].mxu0
    %v210 = vadd.f32 0.0, %v209
    %v211 = vpop.f32.mrb[0].mxu0
    %v212 = vadd.f32 0.0, %v211
    %213 = vdwg.mxu0
    %214 = vxpose.xlu0.b32.start [1/16] %v206, 128
    %215 = vxpose.xlu0.b32.cont [2/16] %v212, 128
    %216 = vxpose.xlu0.b32.cont [3/16] 0.0, 128
    %217 = vxpose.xlu0.b32.cont [4/16] 0.0, 128
    %218 = vxpose.xlu0.b32.cont [5/16] 0.0, 128
    %219 = vxpose.xlu0.b32.cont [6/16] 0.0, 128
    %220 = vxpose.xlu0.b32.cont [7/16] 0.0, 128
    %221 = vxpose.xlu0.b32.cont [8/16] 0.0, 128
    %222 = vxpose.xlu0.b32.cont [9/16] 0.0, 128
    %223 = vxpose.xlu0.b32.cont [10/16] 0.0, 128
    %224 = vxpose.xlu0.b32.cont [11/16] 0.0, 128
    %225 = vxpose.xlu0.b32.cont [12/16] 0.0, 128
    %226 = vxpose.xlu0.b32.cont [13/16] 0.0, 128
    %227 = vxpose.xlu0.b32.cont [14/16] 0.0, 128
    %228 = vxpose.xlu0.b32.cont [15/16] 0.0, 128
    %229 = vxpose.xlu0.b32.end [16/16] 0.0, 128
    %v230 = vpop.trf.xlu0
    %v231 = vpop.trf.xlu0
    %v232 = vpop.trf.xlu0
    %v233 = vpop.trf.xlu0
    %v234 = vpop.trf.xlu0
    %v235 = vpop.trf.xlu0
    %v236 = vpop.trf.xlu0
    %v237 = vpop.trf.xlu0
    %v238 = vpop.trf.xlu0
    %v239 = vpop.trf.xlu0
    %v240 = vpop.trf.xlu0
    %v241 = vpop.trf.xlu0
    %v242 = vpop.trf.xlu0
    %v243 = vpop.trf.xlu0
    %v244 = vpop.trf.xlu0
    %v245 = vpop.trf.xlu0
    %v246 = vlaneseq
    %v247 = vshrl.u32 %v246, 7
    %v248 = vsub.s32 4, %v247
    %v249 = vrot.slane %v230, %v248
    %251 = vbcast.lane.b32.xlu0 %v249, 256
    %v252 = vpop.permute.xlu0 %251
    %s254 = sor.u32 256, 8
    %255 = vbcast.lane.b32.xlu0 %v249, %s254
    %v256 = vpop.permute.xlu0 %255
    %v257 = vlaneseq
    %v258 = vshrl.u32 %v257, 7
    %v259 = vsub.s32 5, %v258
    %v260 = vrot.slane %v230, %v259
    %262 = vbcast.lane.b32.xlu0 %v260, 256
    %v263 = vpop.permute.xlu0 %262
    %s265 = sor.u32 256, 8
    %266 = vbcast.lane.b32.xlu0 %v260, %s265
    %v267 = vpop.permute.xlu0 %266
    %v268 = vlaneseq
    %v269 = vshrl.u32 %v268, 7
    %v270 = vsub.s32 6, %v269
    %v271 = vrot.slane %v230, %v270
    %273 = vbcast.lane.b32.xlu0 %v271, 256
    %v274 = vpop.permute.xlu0 %273
    %s276 = sor.u32 256, 8
    %277 = vbcast.lane.b32.xlu0 %v271, %s276
    %v278 = vpop.permute.xlu0 %277
    %v279 = vlaneseq
    %v280 = vshrl.u32 %v279, 7
    %v281 = vsub.s32 7, %v280
    %v282 = vrot.slane %v230, %v281
    %284 = vbcast.lane.b32.xlu0 %v282, 256
    %v285 = vpop.permute.xlu0 %284
    %s287 = sor.u32 256, 8
    %288 = vbcast.lane.b32.xlu0 %v282, %s287
    %v289 = vpop.permute.xlu0 %288
    %v292 = vunpack.c.l.s4 1966171168
    %v293 = vunpack.c.0.s8 %v292
    %v294 = vlaneseq
    %v295 = vshrl.u32 %v294, 7
    %v296 = vsub.s32 %v293, %v295
    %v297 = vrot.slane %v230, %v296
    %v298 = vcombine.high %v297, %v297
    %v300 = vunpack.c.l.s4 1966171168
    %v301 = vunpack.c.0.s8 %v300
    %v302 = vlaneseq
    %v303 = vshrl.u32 %v302, 7
    %v304 = vsub.s32 %v301, %v303
    %v305 = vrot.slane %v297, %v304
    %v307 = vunpack.c.l.s4 1966171168
    %v308 = vunpack.c.0.s8 %v307
    %v309 = vlaneseq
    %v310 = vshrl.u32 %v309, 7
    %v311 = vsub.s32 %v308, %v310
    %v312 = vrot.slane %v298, %v311
    %v313 = vcombine.high %v305, %v305
    %v314 = vcombine.high %v312, %v312
    %v315 = vlaneseq
    %v316 = vshrl.u32 %v315, 7
    %v317 = vsub.s32 0, %v316
    %v318 = vrot.slane %v305, %v317
    %v319 = vlaneseq
    %v320 = vshrl.u32 %v319, 7
    %v321 = vsub.s32 0, %v320
    %v322 = vrot.slane %v312, %v321
    %v323 = vlaneseq
    %v324 = vshrl.u32 %v323, 7
    %v325 = vsub.s32 0, %v324
    %v326 = vrot.slane %v313, %v325
    %v327 = vlaneseq
    %v328 = vshrl.u32 %v327, 7
    %v329 = vsub.s32 0, %v328
    %v330 = vrot.slane %v314, %v329
    %v335 = vadd.f32 %v252, %v318
    %v336 = vadd.f32 %v256, %v318
    %v337 = vadd.f32 %v263, %v322
    %v338 = vadd.f32 %v267, %v322
    %v339 = vadd.f32 %v274, %v326
    %v340 = vadd.f32 %v278, %v326
    %v341 = vadd.f32 %v285, %v330
    %v342 = vadd.f32 %v289, %v330
    %v343 = vmul.f32 %v335, 0.2
    %v344 = vmul.f32 %v336, 0.2
    %v345 = vmul.f32 %v337, 0.2
    %v346 = vmul.f32 %v338, 0.2
    %v347 = vmul.f32 %v339, 0.2
    %v348 = vmul.f32 %v340, 0.2
    %v349 = vmul.f32 %v341, 0.2
    %v350 = vmul.f32 %v342, 0.2
    %v351 = vmax.f32 %v335, %v343
    %v352 = vmax.f32 %v336, %v344
    %v353 = vmax.f32 %v337, %v345
    %v354 = vmax.f32 %v338, %v346
    %v355 = vmax.f32 %v339, %v347
    %v356 = vmax.f32 %v340, %v348
    %v357 = vmax.f32 %v341, %v349
    %v358 = vmax.f32 %v342, %v350
    %vm359 = vcmp.gt.f32.partialorder %v128, 0.0
    %vm360 = vcmp.gt.f32.partialorder %v129, 0.0
    %v361 = vsel %vm359, 1, 0
    %v362 = vsel %vm360, 1, 0
    %vm363 = vcmp.eq.s32.totalorder %v361, 1
    %vm364 = vcmp.eq.s32.totalorder %v362, 1
    %v365 = vsel %vm363, %v351, -1e+30
    %v366 = vsel %vm364, %v352, -1e+30
    %v367 = vsel %vm363, %v353, -1e+30
    %v368 = vsel %vm364, %v354, -1e+30
    %v369 = vsel %vm363, %v355, -1e+30
    %v370 = vsel %vm364, %v356, -1e+30
    %v371 = vsel %vm363, %v357, -1e+30
    %v372 = vsel %vm364, %v358, -1e+30
    %vm373 = vcmask 130048
    %v374 = vsel %vm373, %v365, -inf
    %375 = vmax.xlane.f32.xlu0 %v374
    %v376 = vpop.xlane.xlu0 %375
    %v377 = vsel %vm373, %v366, -inf
    %378 = vmax.xlane.f32.xlu0 %v377
    %v379 = vpop.xlane.xlu0 %378
    %v380 = vsel %vm373, %v367, -inf
    %381 = vmax.xlane.f32.xlu0 %v380
    %v382 = vpop.xlane.xlu0 %381
    %v383 = vsel %vm373, %v368, -inf
    %384 = vmax.xlane.f32.xlu0 %v383
    %v385 = vpop.xlane.xlu0 %384
    %v386 = vsel %vm373, %v369, -inf
    %387 = vmax.xlane.f32.xlu0 %v386
    %v388 = vpop.xlane.xlu0 %387
    %v389 = vsel %vm373, %v370, -inf
    %390 = vmax.xlane.f32.xlu0 %v389
    %v391 = vpop.xlane.xlu0 %390
    %v392 = vsel %vm373, %v371, -inf
    %393 = vmax.xlane.f32.xlu0 %v392
    %v394 = vpop.xlane.xlu0 %393
    %v395 = vsel %vm373, %v372, -inf
    %396 = vmax.xlane.f32.xlu0 %v395
    %v397 = vpop.xlane.xlu0 %396
    %v398 = vsub.f32 %v365, %v376
    %v399 = vsub.f32 %v366, %v379
    %v400 = vsub.f32 %v367, %v382
    %v401 = vsub.f32 %v368, %v385
    %v402 = vsub.f32 %v369, %v388
    %v403 = vsub.f32 %v370, %v391
    %v404 = vsub.f32 %v371, %v394
    %v405 = vsub.f32 %v372, %v397
    %v406 = vmul.f32 %v398, 1.442695
    %v407 = vpow.pop %v406
    %v408 = vmul.f32 %v399, 1.442695
    %v409 = vpow.pop %v408
    %v410 = vmul.f32 %v400, 1.442695
    %v411 = vpow.pop %v410
    %v412 = vmul.f32 %v401, 1.442695
    %v413 = vpow.pop %v412
    %v414 = vmul.f32 %v402, 1.442695
    %v415 = vpow.pop %v414
    %v416 = vmul.f32 %v403, 1.442695
    %v417 = vpow.pop %v416
    %v418 = vmul.f32 %v404, 1.442695
    %v419 = vpow.pop %v418
    %v420 = vmul.f32 %v405, 1.442695
    %v421 = vpow.pop %v420
    %v422 = vsel %vm373, %v407, 0.0
    %423 = vadd.xlane.f32.xlu0 %v422
    %v424 = vpop.xlane.xlu0 %423
    %v425 = vsel %vm373, %v409, 0.0
    %426 = vadd.xlane.f32.xlu0 %v425
    %v427 = vpop.xlane.xlu0 %426
    %v428 = vsel %vm373, %v411, 0.0
    %429 = vadd.xlane.f32.xlu0 %v428
    %v430 = vpop.xlane.xlu0 %429
    %v431 = vsel %vm373, %v413, 0.0
    %432 = vadd.xlane.f32.xlu0 %v431
    %v433 = vpop.xlane.xlu0 %432
    %v434 = vsel %vm373, %v415, 0.0
    %435 = vadd.xlane.f32.xlu0 %v434
    %v436 = vpop.xlane.xlu0 %435
    %v437 = vsel %vm373, %v417, 0.0
    %438 = vadd.xlane.f32.xlu0 %v437
    %v439 = vpop.xlane.xlu0 %438
    %v440 = vsel %vm373, %v419, 0.0
    %441 = vadd.xlane.f32.xlu0 %v440
    %v442 = vpop.xlane.xlu0 %441
    %v443 = vsel %vm373, %v421, 0.0
    %444 = vadd.xlane.f32.xlu0 %v443
    %v445 = vpop.xlane.xlu0 %444
    %v446 = vmax.f32 %v424, 1e-30
    %v447 = vmax.f32 %v427, 1e-30
    %v448 = vmax.f32 %v430, 1e-30
    %v449 = vmax.f32 %v433, 1e-30
    %v450 = vmax.f32 %v436, 1e-30
    %v451 = vmax.f32 %v439, 1e-30
    %v452 = vmax.f32 %v442, 1e-30
    %v453 = vmax.f32 %v445, 1e-30
    %v454 = vrcp.pop %v446
    %v455 = vmul.f32 %v407, %v454
    %v456 = vrcp.pop %v447
    %v457 = vmul.f32 %v409, %v456
    %v458 = vrcp.pop %v448
    %v459 = vmul.f32 %v411, %v458
    %v460 = vrcp.pop %v449
    %v461 = vmul.f32 %v413, %v460
    %v462 = vrcp.pop %v450
    %v463 = vmul.f32 %v415, %v462
    %v464 = vrcp.pop %v451
    %v465 = vmul.f32 %v417, %v464
    %v466 = vrcp.pop %v452
    %v467 = vmul.f32 %v419, %v466
    %v468 = vrcp.pop %v453
    %v469 = vmul.f32 %v421, %v468
    %472 = vrot.lane.b32.xlu0 %v459, 16
    %v473 = vpop.permute.xlu0 %472
    %474 = vrot.lane.b32.xlu0 %v461, 16
    %v475 = vpop.permute.xlu0 %474
    %480 = vrot.lane.b32.xlu0 %v463, 32
    %v481 = vpop.permute.xlu0 %480
    %482 = vrot.lane.b32.xlu0 %v465, 32
    %v483 = vpop.permute.xlu0 %482
    %488 = vrot.lane.b32.xlu0 %v467, 48
    %v489 = vpop.permute.xlu0 %488
    %490 = vrot.lane.b32.xlu0 %v469, 48
    %v491 = vpop.permute.xlu0 %490
    %v494 = vsel %vm373, %v455, %v473
    %v495 = vsel %vm373, %v457, %v475
    %v496 = vsel %vm130, %v494, %v481
    %v497 = vsel %vm130, %v495, %v483
    %vm498 = vcmask 392192
    %v499 = vsel %vm498, %v496, %v489
    %v500 = vsel %vm498, %v497, %v491
    %503 = vrot.lane.b32.xlu0 %v204, 96
    %v504 = vpop.permute.xlu0 %503
    %505 = vrot.lane.b32.xlu0 %v210, 96
    %v506 = vpop.permute.xlu0 %505
    %509 = vrot.lane.b32.xlu0 %v204, 64
    %v510 = vpop.permute.xlu0 %509
    %511 = vrot.lane.b32.xlu0 %v210, 64
    %v512 = vpop.permute.xlu0 %511
    %515 = vrot.lane.b32.xlu0 %v204, 32
    %v516 = vpop.permute.xlu0 %515
    %517 = vrot.lane.b32.xlu0 %v210, 32
    %v518 = vpop.permute.xlu0 %517
    %vm521 = vcmask 523264
    %v523 = vsel %vm521, %v499, 0
    %v526 = vsel %vm521, %v500, 0
    %528 = vmatprep.subr.mxu0 0.0
    %529 = vmatpush1.msra.mxu0 %v204
    %530 = vmatprep.subr.mxu0 0.0
    %531 = vmatpush1.msra.mxu0 %v210
    %532 = vmatprep.subr.mxu0 0.0
    %533 = vmatpush1.msra.mxu0 %v504
    %534 = vmatprep.subr.mxu0 0.0
    %535 = vmatpush1.msra.mxu0 %v506
    %536 = vmatprep.subr.mxu0 0.0
    %537 = vmatpush1.msra.mxu0 %v510
    %538 = vmatprep.subr.mxu0 0.0
    %539 = vmatpush1.msra.mxu0 %v512
    %540 = vmatprep.subr.mxu0 0.0
    %541 = vmatpush1.msra.mxu0 %v516
    %542 = vmatprep.subr.mxu0 0.0
    %543 = vmatpush1.msra.mxu0 %v518
    %544 = vmatprep.subr.mxu0 0.0
    %545 = vmatpush1.msra.mxu0 0.0
    %546 = vmatprep.subr.mxu0 0.0
    %547 = vmatpush1.msra.mxu0 0.0
    %548 = vmatprep.subr.mxu0 0.0
    %549 = vmatpush1.msra.mxu0 0.0
    %550 = vmatprep.subr.mxu0 0.0
    %551 = vmatpush1.msra.mxu0 0.0
    %552 = vmatprep.subr.mxu0 0.0
    %553 = vmatpush1.msra.mxu0 0.0
    %554 = vmatprep.subr.mxu0 0.0
    %555 = vmatpush1.msra.mxu0 0.0
    %556 = vmatprep.subr.mxu0 0.0
    %557 = vmatpush1.msra.mxu0 0.0
    %558 = vmatprep.subr.mxu0 0.0
    %559 = vmatpush1.msra.mxu0 0.0
    %560 = vmatprep.subr.mxu0 0.0
    %561 = vmatpush1.msra.mxu0 0.0
    %562 = vmatprep.subr.mxu0 0.0
    %563 = vmatpush1.msra.mxu0 0.0
    %564 = vmatprep.subr.mxu0 0.0
    %565 = vmatpush1.msra.mxu0 0.0
    %566 = vmatprep.subr.mxu0 0.0
    %567 = vmatpush1.msra.mxu0 0.0
    %568 = vmatprep.subr.mxu0 0.0
    %569 = vmatpush1.msra.mxu0 0.0
    %570 = vmatprep.subr.mxu0 0.0
    %571 = vmatpush1.msra.mxu0 0.0
    %572 = vmatprep.subr.mxu0 0.0
    %573 = vmatpush1.msra.mxu0 0.0
    %574 = vmatprep.subr.mxu0 0.0
    %575 = vmatpush1.msra.mxu0 0.0
    %576 = vmatprep.subr.mxu0 0.0
    %577 = vmatpush1.msra.mxu0 0.0
    %578 = vmatprep.subr.mxu0 0.0
    %579 = vmatpush1.msra.mxu0 0.0
    %580 = vmatprep.subr.mxu0 0.0
    %581 = vmatpush1.msra.mxu0 0.0
    %582 = vmatprep.subr.mxu0 0.0
    %583 = vmatpush1.msra.mxu0 0.0
    %584 = vmatprep.subr.mxu0 0.0
    %585 = vmatpush1.msra.mxu0 0.0
    %586 = vmatprep.subr.mxu0 0.0
    %587 = vmatpush1.msra.mxu0 0.0
    %588 = vmatprep.subr.mxu0 0.0
    %589 = vmatpush1.msra.mxu0 0.0
    %590 = vmatprep.subr.mxu0 0.0
    %591 = vmatpush1.msra.mxu0 0.0
    %592 = vmatprep.mubr.f32.mxu0 0.0
    %593 = vmatmul.mubr.f32.gmra.mrb[0].mxu0 %v523
    %v594 = vpop.f32.mrb[0].mxu0
    %v595 = vadd.f32 0.0, %v594
    %v596 = vpop.f32.mrb[0].mxu0
    %597 = vmatprep.mubr.f32.mxu0 0.0
    %598 = vmatmul.mubr.f32.gmra.mrb[0].mxu0 %v526
    %v599 = vpop.f32.mrb[0].mxu0
    %v600 = vadd.f32 0.0, %v599
    %v601 = vpop.f32.mrb[0].mxu0
    %602 = vdwg.mxu0
    %v603 = vmul.f32 %v595, 0.25
    %v604 = vmul.f32 %v600, 0.25
    %v605 = vlaneseq
    %v606 = vshrl.u32 %v605, 7
    %v607 = vsub.s32 1, %v606
    %v608 = vrot.slane %v125, %v607
    %v609 = vadd.f32 %v603, %v608
    %v610 = vadd.f32 %v604, %v608
    %v611 = vld [vmem:[#allocation7] sm:$0xff]
    %v612 = vld [vmem:[#allocation7 + $0x8] sm:$0xff]
    %v614 = vsel %vm130, %v609, 0
    %v617 = vsel %vm130, %v610, 0
    %619 = vmatprep.subr.mxu0 %v110
    %620 = vmatpush1.msra.mxu0 %v109
    %621 = vmatprep.subr.mxu0 %v112
    %622 = vmatpush1.msra.mxu0 %v111
    %623 = vmatprep.subr.mxu0 %v114
    %624 = vmatpush1.msra.mxu0 %v113
    %625 = vmatprep.subr.mxu0 %v116
    %626 = vmatpush1.msra.mxu0 %v115
    %627 = vmatprep.subr.mxu0 0.0
    %628 = vmatpush1.msra.mxu0 0.0
    %629 = vmatprep.subr.mxu0 0.0
    %630 = vmatpush1.msra.mxu0 0.0
    %631 = vmatprep.subr.mxu0 0.0
    %632 = vmatpush1.msra.mxu0 0.0
    %633 = vmatprep.subr.mxu0 0.0
    %634 = vmatpush1.msra.mxu0 0.0
    %635 = vmatprep.subr.mxu0 0.0
    %636 = vmatpush1.msra.mxu0 0.0
    %637 = vmatprep.subr.mxu0 0.0
    %638 = vmatpush1.msra.mxu0 0.0
    %639 = vmatprep.subr.mxu0 0.0
    %640 = vmatpush1.msra.mxu0 0.0
    %641 = vmatprep.subr.mxu0 0.0
    %642 = vmatpush1.msra.mxu0 0.0
    %643 = vmatprep.subr.mxu0 0.0
    %644 = vmatpush1.msra.mxu0 0.0
    %645 = vmatprep.subr.mxu0 0.0
    %646 = vmatpush1.msra.mxu0 0.0
    %647 = vmatprep.subr.mxu0 0.0
    %648 = vmatpush1.msra.mxu0 0.0
    %649 = vmatprep.subr.mxu0 0.0
    %650 = vmatpush1.msra.mxu0 0.0
    %651 = vmatprep.subr.mxu0 0.0
    %652 = vmatpush1.msra.mxu0 0.0
    %653 = vmatprep.subr.mxu0 0.0
    %654 = vmatpush1.msra.mxu0 0.0
    %655 = vmatprep.subr.mxu0 0.0
    %656 = vmatpush1.msra.mxu0 0.0
    %657 = vmatprep.subr.mxu0 0.0
    %658 = vmatpush1.msra.mxu0 0.0
    %659 = vmatprep.subr.mxu0 0.0
    %660 = vmatpush1.msra.mxu0 0.0
    %661 = vmatprep.subr.mxu0 0.0
    %662 = vmatpush1.msra.mxu0 0.0
    %663 = vmatprep.subr.mxu0 0.0
    %664 = vmatpush1.msra.mxu0 0.0
    %665 = vmatprep.subr.mxu0 0.0
    %666 = vmatpush1.msra.mxu0 0.0
    %667 = vmatprep.subr.mxu0 0.0
    %668 = vmatpush1.msra.mxu0 0.0
    %669 = vmatprep.subr.mxu0 0.0
    %670 = vmatpush1.msra.mxu0 0.0
    %671 = vmatprep.subr.mxu0 0.0
    %672 = vmatpush1.msra.mxu0 0.0
    %673 = vmatprep.subr.mxu0 0.0
    %674 = vmatpush1.msra.mxu0 0.0
    %675 = vmatprep.subr.mxu0 0.0
    %676 = vmatpush1.msra.mxu0 0.0
    %677 = vmatprep.subr.mxu0 0.0
    %678 = vmatpush1.msra.mxu0 0.0
    %679 = vmatprep.subr.mxu0 0.0
    %680 = vmatpush1.msra.mxu0 0.0
    %681 = vmatprep.subr.mxu0 0.0
    %682 = vmatpush1.msra.mxu0 0.0
    %683 = vmatprep.mubr.f32.mxu0 0.0
    %684 = vmatmul.mubr.f32.gmra.mrb[0].mxu0 %v614
    %v685 = vpop.f32.mrb[0].mxu0
    %v686 = vadd.f32 0.0, %v685
    %v687 = vpop.f32.mrb[0].mxu0
    %v688 = vadd.f32 0.0, %v687
    %689 = vmatprep.mubr.f32.mxu0 0.0
    %690 = vmatmul.mubr.f32.gmra.mrb[0].mxu0 %v617
    %v691 = vpop.f32.mrb[0].mxu0
    %v692 = vadd.f32 0.0, %v691
    %v693 = vpop.f32.mrb[0].mxu0
    %v694 = vadd.f32 0.0, %v693
    %695 = vdwg.mxu0
    %696 = vxpose.xlu0.b32.start [1/16] %v688, 128
    %697 = vxpose.xlu0.b32.cont [2/16] %v694, 128
    %698 = vxpose.xlu0.b32.cont [3/16] 0.0, 128
    %699 = vxpose.xlu0.b32.cont [4/16] 0.0, 128
    %700 = vxpose.xlu0.b32.cont [5/16] 0.0, 128
    %701 = vxpose.xlu0.b32.cont [6/16] 0.0, 128
    %702 = vxpose.xlu0.b32.cont [7/16] 0.0, 128
    %703 = vxpose.xlu0.b32.cont [8/16] 0.0, 128
    %704 = vxpose.xlu0.b32.cont [9/16] 0.0, 128
    %705 = vxpose.xlu0.b32.cont [10/16] 0.0, 128
    %706 = vxpose.xlu0.b32.cont [11/16] 0.0, 128
    %707 = vxpose.xlu0.b32.cont [12/16] 0.0, 128
    %708 = vxpose.xlu0.b32.cont [13/16] 0.0, 128
    %709 = vxpose.xlu0.b32.cont [14/16] 0.0, 128
    %710 = vxpose.xlu0.b32.cont [15/16] 0.0, 128
    %711 = vxpose.xlu0.b32.end [16/16] 0.0, 128
    %v712 = vpop.trf.xlu0
    %v713 = vpop.trf.xlu0
    %v714 = vpop.trf.xlu0
    %v715 = vpop.trf.xlu0
    %v716 = vpop.trf.xlu0
    %v717 = vpop.trf.xlu0
    %v718 = vpop.trf.xlu0
    %v719 = vpop.trf.xlu0
    %v720 = vpop.trf.xlu0
    %v721 = vpop.trf.xlu0
    %v722 = vpop.trf.xlu0
    %v723 = vpop.trf.xlu0
    %v724 = vpop.trf.xlu0
    %v725 = vpop.trf.xlu0
    %v726 = vpop.trf.xlu0
    %v727 = vpop.trf.xlu0
    %v728 = vlaneseq
    %v729 = vshrl.u32 %v728, 7
    %v730 = vsub.s32 4, %v729
    %v731 = vrot.slane %v712, %v730
    %733 = vbcast.lane.b32.xlu0 %v731, 256
    %v734 = vpop.permute.xlu0 %733
    %s736 = sor.u32 256, 8
    %737 = vbcast.lane.b32.xlu0 %v731, %s736
    %v738 = vpop.permute.xlu0 %737
    %v739 = vlaneseq
    %v740 = vshrl.u32 %v739, 7
    %v741 = vsub.s32 5, %v740
    %v742 = vrot.slane %v712, %v741
    %744 = vbcast.lane.b32.xlu0 %v742, 256
    %v745 = vpop.permute.xlu0 %744
    %s747 = sor.u32 256, 8
    %748 = vbcast.lane.b32.xlu0 %v742, %s747
    %v749 = vpop.permute.xlu0 %748
    %v750 = vlaneseq
    %v751 = vshrl.u32 %v750, 7
    %v752 = vsub.s32 6, %v751
    %v753 = vrot.slane %v712, %v752
    %755 = vbcast.lane.b32.xlu0 %v753, 256
    %v756 = vpop.permute.xlu0 %755
    %s758 = sor.u32 256, 8
    %759 = vbcast.lane.b32.xlu0 %v753, %s758
    %v760 = vpop.permute.xlu0 %759
    %v761 = vlaneseq
    %v762 = vshrl.u32 %v761, 7
    %v763 = vsub.s32 7, %v762
    %v764 = vrot.slane %v712, %v763
    %766 = vbcast.lane.b32.xlu0 %v764, 256
    %v767 = vpop.permute.xlu0 %766
    %s769 = sor.u32 256, 8
    %770 = vbcast.lane.b32.xlu0 %v764, %s769
    %v771 = vpop.permute.xlu0 %770
    %v774 = vunpack.c.l.s4 1966171168
    %v775 = vunpack.c.0.s8 %v774
    %v776 = vlaneseq
    %v777 = vshrl.u32 %v776, 7
    %v778 = vsub.s32 %v775, %v777
    %v779 = vrot.slane %v712, %v778
    %v780 = vcombine.high %v779, %v779
    %v782 = vunpack.c.l.s4 1966171168
    %v783 = vunpack.c.0.s8 %v782
    %v784 = vlaneseq
    %v785 = vshrl.u32 %v784, 7
    %v786 = vsub.s32 %v783, %v785
    %v787 = vrot.slane %v779, %v786
    %v789 = vunpack.c.l.s4 1966171168
    %v790 = vunpack.c.0.s8 %v789
    %v791 = vlaneseq
    %v792 = vshrl.u32 %v791, 7
    %v793 = vsub.s32 %v790, %v792
    %v794 = vrot.slane %v780, %v793
    %v795 = vcombine.high %v787, %v787
    %v796 = vcombine.high %v794, %v794
    %v797 = vlaneseq
    %v798 = vshrl.u32 %v797, 7
    %v799 = vsub.s32 0, %v798
    %v800 = vrot.slane %v787, %v799
    %v801 = vlaneseq
    %v802 = vshrl.u32 %v801, 7
    %v803 = vsub.s32 0, %v802
    %v804 = vrot.slane %v794, %v803
    %v805 = vlaneseq
    %v806 = vshrl.u32 %v805, 7
    %v807 = vsub.s32 0, %v806
    %v808 = vrot.slane %v795, %v807
    %v809 = vlaneseq
    %v810 = vshrl.u32 %v809, 7
    %v811 = vsub.s32 0, %v810
    %v812 = vrot.slane %v796, %v811
    %v817 = vadd.f32 %v734, %v800
    %v818 = vadd.f32 %v738, %v800
    %v819 = vadd.f32 %v745, %v804
    %v820 = vadd.f32 %v749, %v804
    %v821 = vadd.f32 %v756, %v808
    %v822 = vadd.f32 %v760, %v808
    %v823 = vadd.f32 %v767, %v812
    %v824 = vadd.f32 %v771, %v812
    %v825 = vmul.f32 %v817, 0.2
    %v826 = vmul.f32 %v818, 0.2
    %v827 = vmul.f32 %v819, 0.2
    %v828 = vmul.f32 %v820, 0.2
    %v829 = vmul.f32 %v821, 0.2
    %v830 = vmul.f32 %v822, 0.2
    %v831 = vmul.f32 %v823, 0.2
    %v832 = vmul.f32 %v824, 0.2
    %v833 = vmax.f32 %v817, %v825
    %v834 = vmax.f32 %v818, %v826
    %v835 = vmax.f32 %v819, %v827
    %v836 = vmax.f32 %v820, %v828
    %v837 = vmax.f32 %v821, %v829
    %v838 = vmax.f32 %v822, %v830
    %v839 = vmax.f32 %v823, %v831
    %v840 = vmax.f32 %v824, %v832
    %vm841 = vcmp.gt.f32.partialorder %v611, 0.0
    %vm842 = vcmp.gt.f32.partialorder %v612, 0.0
    %v843 = vsel %vm841, 1, 0
    %v844 = vsel %vm842, 1, 0
    %vm845 = vcmp.eq.s32.totalorder %v843, 1
    %vm846 = vcmp.eq.s32.totalorder %v844, 1
    %v847 = vsel %vm845, %v833, -1e+30
    %v848 = vsel %vm846, %v834, -1e+30
    %v849 = vsel %vm845, %v835, -1e+30
    %v850 = vsel %vm846, %v836, -1e+30
    %v851 = vsel %vm845, %v837, -1e+30
    %v852 = vsel %vm846, %v838, -1e+30
    %v853 = vsel %vm845, %v839, -1e+30
    %v854 = vsel %vm846, %v840, -1e+30
    %v855 = vsel %vm373, %v847, -inf
    %856 = vmax.xlane.f32.xlu0 %v855
    %v857 = vpop.xlane.xlu0 %856
    %v858 = vsel %vm373, %v848, -inf
    %859 = vmax.xlane.f32.xlu0 %v858
    %v860 = vpop.xlane.xlu0 %859
    %v861 = vsel %vm373, %v849, -inf
    %862 = vmax.xlane.f32.xlu0 %v861
    %v863 = vpop.xlane.xlu0 %862
    %v864 = vsel %vm373, %v850, -inf
    %865 = vmax.xlane.f32.xlu0 %v864
    %v866 = vpop.xlane.xlu0 %865
    %v867 = vsel %vm373, %v851, -inf
    %868 = vmax.xlane.f32.xlu0 %v867
    %v869 = vpop.xlane.xlu0 %868
    %v870 = vsel %vm373, %v852, -inf
    %871 = vmax.xlane.f32.xlu0 %v870
    %v872 = vpop.xlane.xlu0 %871
    %v873 = vsel %vm373, %v853, -inf
    %874 = vmax.xlane.f32.xlu0 %v873
    %v875 = vpop.xlane.xlu0 %874
    %v876 = vsel %vm373, %v854, -inf
    %877 = vmax.xlane.f32.xlu0 %v876
    %v878 = vpop.xlane.xlu0 %877
    %v879 = vsub.f32 %v847, %v857
    %v880 = vsub.f32 %v848, %v860
    %v881 = vsub.f32 %v849, %v863
    %v882 = vsub.f32 %v850, %v866
    %v883 = vsub.f32 %v851, %v869
    %v884 = vsub.f32 %v852, %v872
    %v885 = vsub.f32 %v853, %v875
    %v886 = vsub.f32 %v854, %v878
    %v887 = vmul.f32 %v879, 1.442695
    %v888 = vpow.pop %v887
    %v889 = vmul.f32 %v880, 1.442695
    %v890 = vpow.pop %v889
    %v891 = vmul.f32 %v881, 1.442695
    %v892 = vpow.pop %v891
    %v893 = vmul.f32 %v882, 1.442695
    %v894 = vpow.pop %v893
    %v895 = vmul.f32 %v883, 1.442695
    %v896 = vpow.pop %v895
    %v897 = vmul.f32 %v884, 1.442695
    %v898 = vpow.pop %v897
    %v899 = vmul.f32 %v885, 1.442695
    %v900 = vpow.pop %v899
    %v901 = vmul.f32 %v886, 1.442695
    %v902 = vpow.pop %v901
    %v903 = vsel %vm373, %v888, 0.0
    %904 = vadd.xlane.f32.xlu0 %v903
    %v905 = vpop.xlane.xlu0 %904
    %v906 = vsel %vm373, %v890, 0.0
    %907 = vadd.xlane.f32.xlu0 %v906
    %v908 = vpop.xlane.xlu0 %907
    %v909 = vsel %vm373, %v892, 0.0
    %910 = vadd.xlane.f32.xlu0 %v909
    %v911 = vpop.xlane.xlu0 %910
    %v912 = vsel %vm373, %v894, 0.0
    %913 = vadd.xlane.f32.xlu0 %v912
    %v914 = vpop.xlane.xlu0 %913
    %v915 = vsel %vm373, %v896, 0.0
    %916 = vadd.xlane.f32.xlu0 %v915
    %v917 = vpop.xlane.xlu0 %916
    %v918 = vsel %vm373, %v898, 0.0
    %919 = vadd.xlane.f32.xlu0 %v918
    %v920 = vpop.xlane.xlu0 %919
    %v921 = vsel %vm373, %v900, 0.0
    %922 = vadd.xlane.f32.xlu0 %v921
    %v923 = vpop.xlane.xlu0 %922
    %v924 = vsel %vm373, %v902, 0.0
    %925 = vadd.xlane.f32.xlu0 %v924
    %v926 = vpop.xlane.xlu0 %925
    %v927 = vmax.f32 %v905, 1e-30
    %v928 = vmax.f32 %v908, 1e-30
    %v929 = vmax.f32 %v911, 1e-30
    %v930 = vmax.f32 %v914, 1e-30
    %v931 = vmax.f32 %v917, 1e-30
    %v932 = vmax.f32 %v920, 1e-30
    %v933 = vmax.f32 %v923, 1e-30
    %v934 = vmax.f32 %v926, 1e-30
    %v935 = vrcp.pop %v927
    %v936 = vmul.f32 %v888, %v935
    %v937 = vrcp.pop %v928
    %v938 = vmul.f32 %v890, %v937
    %v939 = vrcp.pop %v929
    %v940 = vmul.f32 %v892, %v939
    %v941 = vrcp.pop %v930
    %v942 = vmul.f32 %v894, %v941
    %v943 = vrcp.pop %v931
    %v944 = vmul.f32 %v896, %v943
    %v945 = vrcp.pop %v932
    %v946 = vmul.f32 %v898, %v945
    %v947 = vrcp.pop %v933
    %v948 = vmul.f32 %v900, %v947
    %v949 = vrcp.pop %v934
    %v950 = vmul.f32 %v902, %v949
    %953 = vrot.lane.b32.xlu0 %v940, 16
    %v954 = vpop.permute.xlu0 %953
    %955 = vrot.lane.b32.xlu0 %v942, 16
    %v956 = vpop.permute.xlu0 %955
    %961 = vrot.lane.b32.xlu0 %v944, 32
    %v962 = vpop.permute.xlu0 %961
    %963 = vrot.lane.b32.xlu0 %v946, 32
    %v964 = vpop.permute.xlu0 %963
    %969 = vrot.lane.b32.xlu0 %v948, 48
    %v970 = vpop.permute.xlu0 %969
    %971 = vrot.lane.b32.xlu0 %v950, 48
    %v972 = vpop.permute.xlu0 %971
    %v975 = vsel %vm373, %v936, %v954
    %v976 = vsel %vm373, %v938, %v956
    %v977 = vsel %vm130, %v975, %v962
    %v978 = vsel %vm130, %v976, %v964
    %v979 = vsel %vm498, %v977, %v970
    %v980 = vsel %vm498, %v978, %v972
    %983 = vrot.lane.b32.xlu0 %v686, 96
    %v984 = vpop.permute.xlu0 %983
    %985 = vrot.lane.b32.xlu0 %v692, 96
    %v986 = vpop.permute.xlu0 %985
    %989 = vrot.lane.b32.xlu0 %v686, 64
    %v990 = vpop.permute.xlu0 %989
    %991 = vrot.lane.b32.xlu0 %v692, 64
    %v992 = vpop.permute.xlu0 %991
    %995 = vrot.lane.b32.xlu0 %v686, 32
    %v996 = vpop.permute.xlu0 %995
    %997 = vrot.lane.b32.xlu0 %v692, 32
    %v998 = vpop.permute.xlu0 %997
    %v1002 = vsel %vm521, %v979, 0
    %v1005 = vsel %vm521, %v980, 0
    %1007 = vmatprep.subr.mxu0 0.0
    %1008 = vmatpush1.msra.mxu0 %v686
    %1009 = vmatprep.subr.mxu0 0.0
    %1010 = vmatpush1.msra.mxu0 %v692
    %1011 = vmatprep.subr.mxu0 0.0
    %1012 = vmatpush1.msra.mxu0 %v984
    %1013 = vmatprep.subr.mxu0 0.0
    %1014 = vmatpush1.msra.mxu0 %v986
    %1015 = vmatprep.subr.mxu0 0.0
    %1016 = vmatpush1.msra.mxu0 %v990
    %1017 = vmatprep.subr.mxu0 0.0
    %1018 = vmatpush1.msra.mxu0 %v992
    %1019 = vmatprep.subr.mxu0 0.0
    %1020 = vmatpush1.msra.mxu0 %v996
    %1021 = vmatprep.subr.mxu0 0.0
    %1022 = vmatpush1.msra.mxu0 %v998
    %1023 = vmatprep.subr.mxu0 0.0
    %1024 = vmatpush1.msra.mxu0 0.0
    %1025 = vmatprep.subr.mxu0 0.0
    %1026 = vmatpush1.msra.mxu0 0.0
    %1027 = vmatprep.subr.mxu0 0.0
    %1028 = vmatpush1.msra.mxu0 0.0
    %1029 = vmatprep.subr.mxu0 0.0
    %1030 = vmatpush1.msra.mxu0 0.0
    %1031 = vmatprep.subr.mxu0 0.0
    %1032 = vmatpush1.msra.mxu0 0.0
    %1033 = vmatprep.subr.mxu0 0.0
    %1034 = vmatpush1.msra.mxu0 0.0
    %1035 = vmatprep.subr.mxu0 0.0
    %1036 = vmatpush1.msra.mxu0 0.0
    %1037 = vmatprep.subr.mxu0 0.0
    %1038 = vmatpush1.msra.mxu0 0.0
    %1039 = vmatprep.subr.mxu0 0.0
    %1040 = vmatpush1.msra.mxu0 0.0
    %1041 = vmatprep.subr.mxu0 0.0
    %1042 = vmatpush1.msra.mxu0 0.0
    %1043 = vmatprep.subr.mxu0 0.0
    %1044 = vmatpush1.msra.mxu0 0.0
    %1045 = vmatprep.subr.mxu0 0.0
    %1046 = vmatpush1.msra.mxu0 0.0
    %1047 = vmatprep.subr.mxu0 0.0
    %1048 = vmatpush1.msra.mxu0 0.0
    %1049 = vmatprep.subr.mxu0 0.0
    %1050 = vmatpush1.msra.mxu0 0.0
    %1051 = vmatprep.subr.mxu0 0.0
    %1052 = vmatpush1.msra.mxu0 0.0
    %1053 = vmatprep.subr.mxu0 0.0
    %1054 = vmatpush1.msra.mxu0 0.0
    %1055 = vmatprep.subr.mxu0 0.0
    %1056 = vmatpush1.msra.mxu0 0.0
    %1057 = vmatprep.subr.mxu0 0.0
    %1058 = vmatpush1.msra.mxu0 0.0
    %1059 = vmatprep.subr.mxu0 0.0
    %1060 = vmatpush1.msra.mxu0 0.0
    %1061 = vmatprep.subr.mxu0 0.0
    %1062 = vmatpush1.msra.mxu0 0.0
    %1063 = vmatprep.subr.mxu0 0.0
    %1064 = vmatpush1.msra.mxu0 0.0
    %1065 = vmatprep.subr.mxu0 0.0
    %1066 = vmatpush1.msra.mxu0 0.0
    %1067 = vmatprep.subr.mxu0 0.0
    %1068 = vmatpush1.msra.mxu0 0.0
    %1069 = vmatprep.subr.mxu0 0.0
    %1070 = vmatpush1.msra.mxu0 0.0
    %1071 = vmatprep.mubr.f32.mxu0 0.0
    %1072 = vmatmul.mubr.f32.gmra.mrb[0].mxu0 %v1002
    %v1073 = vpop.f32.mrb[0].mxu0
    %v1074 = vadd.f32 0.0, %v1073
    %v1075 = vpop.f32.mrb[0].mxu0
    %1076 = vmatprep.mubr.f32.mxu0 0.0
    %1077 = vmatmul.mubr.f32.gmra.mrb[0].mxu0 %v1005
    %v1078 = vpop.f32.mrb[0].mxu0
    %v1079 = vadd.f32 0.0, %v1078
    %v1080 = vpop.f32.mrb[0].mxu0
    %1081 = vdwg.mxu0
    %v1082 = vmul.f32 %v1074, 0.25
    %v1083 = vmul.f32 %v1079, 0.25
    %v1084 = vadd.f32 %v1082, %v608
    %v1085 = vadd.f32 %v1083, %v608
    %v1086 = vld [vmem:[%s5] sm:$0xff]
    %v1087 = vld [vmem:[%s5 + $0x8] sm:$0xff]
    %v1088 = vld [vmem:[#allocation11] sm:$0xff]
    %v1089 = vld [vmem:[#allocation11 + $0x8] sm:$0xff]
    %1092 = vrot.lane.b32.xlu0 %v1086, 32
    %v1093 = vpop.permute.xlu0 %1092
    %1094 = vrot.lane.b32.xlu0 %v1087, 32
    %v1095 = vpop.permute.xlu0 %1094
    %v1098 = vsel %vm130, %v1084, %v1093
    %v1099 = vsel %vm130, %v1085, %v1095
    %v1100 = vlaneseq
    %v1101 = vshrl.u32 %v1100, 7
    %v1102 = vsub.s32 0, %v1101
    %v1103 = vrot.slane %v125, %v1102
    %v1105 = vsel %vm521, %v1098, 0
    %v1108 = vsel %vm521, %v1099, 0
    %1110 = vmatprep.subr.mxu0 0.0
    %1111 = vmatpush1.msra.mxu0 %v117
    %1112 = vmatprep.subr.mxu0 0.0
    %1113 = vmatpush1.msra.mxu0 %v118
    %1114 = vmatprep.subr.mxu0 0.0
    %1115 = vmatpush1.msra.mxu0 %v119
    %1116 = vmatprep.subr.mxu0 0.0
    %1117 = vmatpush1.msra.mxu0 %v120
    %1118 = vmatprep.subr.mxu0 0.0
    %1119 = vmatpush1.msra.mxu0 %v121
    %1120 = vmatprep.subr.mxu0 0.0
    %1121 = vmatpush1.msra.mxu0 %v122
    %1122 = vmatprep.subr.mxu0 0.0
    %1123 = vmatpush1.msra.mxu0 %v123
    %1124 = vmatprep.subr.mxu0 0.0
    %1125 = vmatpush1.msra.mxu0 %v124
    %1126 = vmatprep.subr.mxu0 0.0
    %1127 = vmatpush1.msra.mxu0 0.0
    %1128 = vmatprep.subr.mxu0 0.0
    %1129 = vmatpush1.msra.mxu0 0.0
    %1130 = vmatprep.subr.mxu0 0.0
    %1131 = vmatpush1.msra.mxu0 0.0
    %1132 = vmatprep.subr.mxu0 0.0
    %1133 = vmatpush1.msra.mxu0 0.0
    %1134 = vmatprep.subr.mxu0 0.0
    %1135 = vmatpush1.msra.mxu0 0.0
    %1136 = vmatprep.subr.mxu0 0.0
    %1137 = vmatpush1.msra.mxu0 0.0
    %1138 = vmatprep.subr.mxu0 0.0
    %1139 = vmatpush1.msra.mxu0 0.0
    %1140 = vmatprep.subr.mxu0 0.0
    %1141 = vmatpush1.msra.mxu0 0.0
    %1142 = vmatprep.subr.mxu0 0.0
    %1143 = vmatpush1.msra.mxu0 0.0
    %1144 = vmatprep.subr.mxu0 0.0
    %1145 = vmatpush1.msra.mxu0 0.0
    %1146 = vmatprep.subr.mxu0 0.0
    %1147 = vmatpush1.msra.mxu0 0.0
    %1148 = vmatprep.subr.mxu0 0.0
    %1149 = vmatpush1.msra.mxu0 0.0
    %1150 = vmatprep.subr.mxu0 0.0
    %1151 = vmatpush1.msra.mxu0 0.0
    %1152 = vmatprep.subr.mxu0 0.0
    %1153 = vmatpush1.msra.mxu0 0.0
    %1154 = vmatprep.subr.mxu0 0.0
    %1155 = vmatpush1.msra.mxu0 0.0
    %1156 = vmatprep.subr.mxu0 0.0
    %1157 = vmatpush1.msra.mxu0 0.0
    %1158 = vmatprep.subr.mxu0 0.0
    %1159 = vmatpush1.msra.mxu0 0.0
    %1160 = vmatprep.subr.mxu0 0.0
    %1161 = vmatpush1.msra.mxu0 0.0
    %1162 = vmatprep.subr.mxu0 0.0
    %1163 = vmatpush1.msra.mxu0 0.0
    %1164 = vmatprep.subr.mxu0 0.0
    %1165 = vmatpush1.msra.mxu0 0.0
    %1166 = vmatprep.subr.mxu0 0.0
    %1167 = vmatpush1.msra.mxu0 0.0
    %1168 = vmatprep.subr.mxu0 0.0
    %1169 = vmatpush1.msra.mxu0 0.0
    %1170 = vmatprep.subr.mxu0 0.0
    %1171 = vmatpush1.msra.mxu0 0.0
    %1172 = vmatprep.subr.mxu0 0.0
    %1173 = vmatpush1.msra.mxu0 0.0
    %1174 = vmatprep.mubr.f32.mxu0 0.0
    %1175 = vmatmul.mubr.f32.gmra.mrb[0].mxu0 %v1105
    %v1176 = vpop.f32.mrb[0].mxu0
    %v1177 = vadd.f32 %v1103, %v1176
    %v1178 = vpop.f32.mrb[0].mxu0
    %1179 = vmatprep.mubr.f32.mxu0 0.0
    %1180 = vmatmul.mubr.f32.gmra.mrb[0].mxu0 %v1108
    %v1181 = vpop.f32.mrb[0].mxu0
    %v1182 = vadd.f32 %v1103, %v1181
    %v1183 = vpop.f32.mrb[0].mxu0
    %1184 = vdwg.mxu0
    %v1185 = vxor.u32 %v1177, 2147483648
    %v1186 = vxor.u32 %v1182, 2147483648
    %v1187 = vmul.f32 %v1185, 1.442695
    %v1188 = vpow.pop %v1187
    %v1189 = vmul.f32 %v1186, 1.442695
    %v1190 = vpow.pop %v1189
    %v1191 = vadd.f32 %v1188, 1.0
    %v1192 = vadd.f32 %v1190, 1.0
    %v1193 = vrcp.pop %v1191
    %v1194 = vmul.f32 1.0, %v1193
    %v1195 = vrcp.pop %v1192
    %v1196 = vmul.f32 1.0, %v1195
    %v1197 = vtanh.pop %v1177
    %v1198 = vtanh.pop %v1182
    %1201 = vrot.lane.b32.xlu0 %v1088, 32
    %v1202 = vpop.permute.xlu0 %1201
    %1203 = vrot.lane.b32.xlu0 %v1089, 32
    %v1204 = vpop.permute.xlu0 %1203
    %v1207 = vmul.f32 %v1194, %v1202
    %v1208 = vmul.f32 %v1196, %v1204
    %1211 = vrot.lane.b32.xlu0 %v1197, 64
    %v1212 = vpop.permute.xlu0 %1211
    %1213 = vrot.lane.b32.xlu0 %v1198, 64
    %v1214 = vpop.permute.xlu0 %1213
    %v1217 = vmul.f32 %v1194, %v1212
    %v1218 = vmul.f32 %v1196, %v1214
    %1221 = vrot.lane.b32.xlu0 %v1217, 32
    %v1222 = vpop.permute.xlu0 %1221
    %1223 = vrot.lane.b32.xlu0 %v1218, 32
    %v1224 = vpop.permute.xlu0 %1223
    %v1227 = vadd.f32 %v1207, %v1222
    %v1228 = vadd.f32 %v1208, %v1224
    %v1229 = vtanh.pop %v1227
    %v1230 = vtanh.pop %v1228
    %1233 = vrot.lane.b32.xlu0 %v1229, 64
    %v1234 = vpop.permute.xlu0 %1233
    %1235 = vrot.lane.b32.xlu0 %v1230, 64
    %v1236 = vpop.permute.xlu0 %1235
    %v1239 = vmul.f32 %v1194, %v1234
    %v1240 = vmul.f32 %v1196, %v1236
    %1243 = vrot.lane.b32.xlu0 %v1239, 32
    %v1244 = vpop.permute.xlu0 %1243
    %1245 = vrot.lane.b32.xlu0 %v1240, 32
    %v1246 = vpop.permute.xlu0 %1245
    %v1249 = vsel %vm130, %v1244, %v1227
    %v1250 = vsel %vm130, %v1246, %v1228
    %1251 = vst.msk [vmem:[#allocation13] sm:$0xff] %vm521, %v1249
    %1252 = vst.msk [vmem:[#allocation13 + $0x8] sm:$0xff] %vm521, %v1250
    // Predicated region
    $region54: #{tpu_custom_call.1} parent=1 // pred_check
      _
    $region55: #{tpu_custom_call.1} parent=1 // pred_check_branch
      %1254 = sbr.rel (0) target = $region57
    $region56: #{tpu_custom_call.1} parent=1 // pred_region
      %s1256 = ssub.s32 256, 256
      %1257 = vsyncadd [#allocation4], %s1256
      %s1258 = sshll.u32 [#allocation13], 4
      %s1259 = int_to_ptr.vmem [resolvable:$true] %s1258
      %1264 = dma.vmem_to_hbm [thread:$0]  %s1259, 256, %s7, [#allocation4], 128, 128, 8
    $region57: #{tpu_custom_call.1} parent=1 // pred_fallthru
      _
    // Predicated region
    $region58: #{tpu_custom_call.1} parent=1 // pred_check
      _
    $region59: #{tpu_custom_call.1} parent=1 // pred_check_branch
      %1266 = sbr.rel (0) target = $region61
    $region60: #{tpu_custom_call.1} parent=1 // pred_region
      %1267 = dma.done [#allocation4], 256
    $region61: #{tpu_custom_call.1} parent=1 // pred_fallthru
      _
    %1268 = vsyncpa [#allocation3], 1
    %1269 = vsyncpa [#allocation6], 1
    %1270 = vsyncpa [#allocation9], 1
    %1271 = vsyncpa [#allocation12], 1
    %1272 = vsyncpa [#allocation4], 1

</llo_original>
